<compile_context>
chip_gen: v7x
topology: tpu7x:2x2x1
jax: 0.10.0
libtpu: 0.0.40
codegen_flags: <defaults>
</compile_context>

<pallas_src>
import jax
import jax.numpy as jnp
from jax.experimental import pallas as pl
from jax.experimental.pallas import tpu as pltpu


def _round_up(n, m):
    return ((n + m - 1) // m) * m


def _cab_kernel(x_ref, w1_ref, b1_ref, caw1_ref, caw2_ref, w2_ref, b2_ref,
                g2_ref, o_ref):
    x = x_ref[...]                                             # (TM, C) bf16 storage

    # fc1: bf16 matmul, f32 accumulation; bias + relu in f32.
    h = jnp.dot(x, w1_ref[...], preferred_element_type=jnp.float32)
    h = jnp.maximum(h + b1_ref[...], 0.0)                      # (TM, Cr) f32

    # ChannelAttentionLayer: sigmoid(relu(h @ Wc1) @ Wc2), applied per token
    # (no pooling in the original module).  Tiny cr x cr weights kept in f32.
    y = jnp.maximum(
        jnp.dot(h, caw1_ref[...], preferred_element_type=jnp.float32), 0.0)
    y = jax.nn.sigmoid(
        jnp.dot(y, caw2_ref[...], preferred_element_type=jnp.float32))
    h = h * y                                                  # (TM, Cr) f32

    # fc2 (gamma1 already folded into W2 / b2 on the host).
    out1 = jnp.dot(h.astype(w2_ref.dtype), w2_ref[...],
                   preferred_element_type=jnp.float32)
    out1 = out1 + b2_ref[...]                                  # (TM, C) f32

    g2 = g2_ref[0]                                             # SMEM scalar
    o_ref[...] = (out1 + g2 * x.astype(jnp.float32)).astype(o_ref.dtype)


def channel_attention_block(x, params, *, row_tile=None,
                            compute_dtype=jnp.bfloat16):
    """x: (bs, ns, dim).  params: dict of weights (see init_params)."""
    bs, ns, dim = x.shape
    cr = params["w1"].shape[1]
    out_dim = params["w2"].shape[1]
    assert out_dim == dim, "residual add requires out_channels == in_channels"

    m = bs * ns

    # --- tile sizing: HBM-bound, so pick the biggest row tile whose
    # double-buffered IO + f32 temporaries stay well inside VMEM
    # (conservative enough for v7x's 64 MiB physical VMEM).
    # per row: 2x bf16 x-tile (double-buffered) + 2x out-tile (<=f32, dbl-buf)
    #          + f32 out1/x temporaries + f32 h/y temporaries.
    per_row_bytes = 20 * dim + 12 * cr
    if row_tile is None:
        row_tile = max(128, min(2048, (24 * 1024 * 1024) // per_row_bytes))
    row_tile = min(row_tile, _round_up(m, 8))
    row_tile = max(8, _round_up(row_tile, 8))

    m_pad = _round_up(m, row_tile)
    grid = m_pad // row_tile

    # --- host-side prep: fold gamma1 into fc2, cast big operands to bf16.
    g1 = jnp.asarray(params["gamma1"], jnp.float32)
    g2 = jnp.asarray(params["gamma2"], jnp.float32).reshape(1)
    w1 = params["w1"].astype(compute_dtype)
    w2 = (g1 * params["w2"]).astype(compute_dtype)
    b1 = params["b1"].reshape(1, cr).astype(jnp.float32)
    b2 = (g1 * params["b2"]).reshape(1, dim).astype(jnp.float32)
    caw1 = params["ca_w1"].astype(jnp.float32)
    caw2 = params["ca_w2"].astype(jnp.float32)

    x2 = x.reshape(m, dim).astype(compute_dtype)
    if m_pad != m:
        x2 = jnp.pad(x2, ((0, m_pad - m), (0, 0)))

    # --- VMEM budget: tile IO + (double-buffered) weights + slack.
    weight_bytes = ((w1.size + w2.size) * 2
                    + (caw1.size + caw2.size + b1.size + b2.size) * 4)
    est = row_tile * per_row_bytes + 2 * weight_bytes + (4 << 20)
    vmem_limit = int(min(max(est, 32 << 20), 56 << 20))

    grid_spec = pltpu.PrefetchScalarGridSpec(
        num_scalar_prefetch=0,
        grid=(grid,),
        in_specs=[
            pl.BlockSpec((row_tile, dim), lambda i: (i, 0)),   # x rows (bf16)
            pl.BlockSpec((dim, cr), lambda i: (0, 0)),         # W1^T (bf16)
            pl.BlockSpec((1, cr), lambda i: (0, 0)),           # b1 (f32)
            pl.BlockSpec((cr, cr), lambda i: (0, 0)),          # Wc1^T (f32)
            pl.BlockSpec((cr, cr), lambda i: (0, 0)),          # Wc2^T (f32)
            pl.BlockSpec((cr, dim), lambda i: (0, 0)),         # gamma1*W2^T (bf16)
            pl.BlockSpec((1, dim), lambda i: (0, 0)),          # gamma1*b2 (f32)
            pl.BlockSpec(memory_space=pltpu.SMEM),             # gamma2 (1,) scalar
        ],
        out_specs=pl.BlockSpec((row_tile, dim), lambda i: (i, 0)),
    )

    out = pl.pallas_call(
        _cab_kernel,
        out_shape=jax.ShapeDtypeStruct((m_pad, dim), x.dtype),
        grid_spec=grid_spec,
        compiler_params=pltpu.CompilerParams(
            dimension_semantics=("parallel",),
            vmem_limit_bytes=vmem_limit),
    )(x2, w1, b1, caw1, caw2, w2, b2, g2)

    return out[:m].reshape(bs, ns, dim)


def init_params(key, in_channels, out_channels, reduction=16):
    cr = in_channels // reduction
    k = jax.random.split(key, 6)

    def xavier(key, fan_in, fan_out):
        # matches nn.init.xavier_normal_ std = sqrt(2 / (fan_in + fan_out));
        # stored transposed: (fan_in, fan_out) so the kernel does x @ W
        std = (2.0 / (fan_in + fan_out)) ** 0.5
        return std * jax.random.normal(key, (fan_in, fan_out), jnp.float32)

    def uniform_bias(key, fan_in, size):
        bound = 1.0 / (fan_in ** 0.5)
        return jax.random.uniform(key, (size,), jnp.float32, -bound, bound)

    return {
        "w1": xavier(k[0], in_channels, cr),
        "b1": uniform_bias(k[1], in_channels, cr),
        "ca_w1": xavier(k[2], cr, cr),
        "ca_w2": xavier(k[3], cr, cr),
        "w2": xavier(k[4], cr, out_channels),
        "b2": uniform_bias(k[5], cr, out_channels),
        "gamma1": jnp.ones((), jnp.float32),
        "gamma2": jnp.ones((), jnp.float32),
    }


def _reference_f32(x, p):
    # pure-f32 JAX reference of the PyTorch forward
    h = jax.nn.relu(x @ p["w1"] + p["b1"])
    y = jax.nn.sigmoid(jax.nn.relu(h @ p["ca_w1"]) @ p["ca_w2"])
    h = h * y
    out1 = h @ p["w2"] + p["b2"]
    return p["gamma1"] * out1 + p["gamma2"] * x


def _reference_quantized(x, p, compute_dtype=jnp.bfloat16):
    # mirrors the kernel's dtype path exactly (bf16 storage, f32 accum/elementwise)
    cd = compute_dtype
    g1 = jnp.asarray(p["gamma1"], jnp.float32)
    g2 = jnp.asarray(p["gamma2"], jnp.float32)
    xq = x.astype(cd)
    w1 = p["w1"].astype(cd)
    w2 = (g1 * p["w2"]).astype(cd)
    b2 = g1 * p["b2"]
    h = jnp.maximum(
        jnp.dot(xq, w1, preferred_element_type=jnp.float32) + p["b1"], 0.0)
    y = jnp.maximum(
        jnp.dot(h, p["ca_w1"], preferred_element_type=jnp.float32), 0.0)
    y = jax.nn.sigmoid(
        jnp.dot(y, p["ca_w2"], preferred_element_type=jnp.float32))
    h = h * y
    out1 = jnp.dot(h.astype(cd), w2, preferred_element_type=jnp.float32) + b2
    return out1 + g2 * xq.astype(jnp.float32)


if __name__ == "__main__":
    key = jax.random.PRNGKey(0)
    kx, kp = jax.random.split(key)

    bs, ns = 2, 8
    in_channels = out_channels = 64
    reduction = 16

    x = jax.random.normal(kx, (bs, ns, in_channels), jnp.float32)
    params = init_params(kp, in_channels, out_channels, reduction)

    out = channel_attention_block(x, params)
    out = jax.block_until_ready(out)

    assert out.shape == (bs, ns, out_channels)

    # tight check vs a reference that uses the same bf16 storage / f32 accum path
    ref_q = _reference_quantized(x, params)
    err_q = float(jnp.max(jnp.abs(out - ref_q)))
    assert jnp.allclose(out, ref_q, atol=2e-3, rtol=2e-3), err_q

    # loose sanity check vs the full-f32 PyTorch-equivalent reference
    ref_f = _reference_f32(x, params)
    err_f = float(jnp.max(jnp.abs(out - ref_f)))
    assert jnp.allclose(out, ref_f, atol=1e-1, rtol=1e-1), err_f

    print("KERNEL_OK")
</pallas_src>

<mosaic_0001>
module attributes {stable_mosaic.version = 11 : i64} {
  func.func @_cab_kernel(%arg0: i32, %arg1: memref<16x64xbf16, #tpu.memory_space<vmem>>, %arg2: memref<64x4xbf16, #tpu.memory_space<vmem>>, %arg3: memref<1x4xf32, #tpu.memory_space<vmem>>, %arg4: memref<4x4xf32, #tpu.memory_space<vmem>>, %arg5: memref<4x4xf32, #tpu.memory_space<vmem>>, %arg6: memref<4x64xbf16, #tpu.memory_space<vmem>>, %arg7: memref<1x64xf32, #tpu.memory_space<vmem>>, %arg8: memref<1xf32, #tpu.memory_space<smem>>, %arg9: memref<16x64xf32, #tpu.memory_space<vmem>>) attributes {dimension_semantics = [#tpu.dimension_semantics<parallel>], iteration_bounds = array<i64: 1>, scalar_prefetch = 0 : i64, scratch_operands = 0 : i64, tpu.core_type = #tpu.core_type<tc>, window_params = [{transform_indices = @transform_0, window_bounds = array<i64: 16, 64>}, {pipeline_mode = #tpu.pipeline_mode<synchronous>, transform_indices = @transform_1, window_bounds = array<i64: 64, 4>}, {pipeline_mode = #tpu.pipeline_mode<synchronous>, transform_indices = @transform_2, window_bounds = array<i64: 1, 4>}, {pipeline_mode = #tpu.pipeline_mode<synchronous>, transform_indices = @transform_3, window_bounds = array<i64: 4, 4>}, {pipeline_mode = #tpu.pipeline_mode<synchronous>, transform_indices = @transform_4, window_bounds = array<i64: 4, 4>}, {pipeline_mode = #tpu.pipeline_mode<synchronous>, transform_indices = @transform_5, window_bounds = array<i64: 4, 64>}, {pipeline_mode = #tpu.pipeline_mode<synchronous>, transform_indices = @transform_6, window_bounds = array<i64: 1, 64>}, {transform_indices = @transform_7, window_bounds = array<i64: 1>}, {transform_indices = @transform_8, window_bounds = array<i64: 16, 64>}]} {
    %c0 = arith.constant 0 : index
    %c0_0 = arith.constant 0 : index
    %0 = vector.load %arg1[%c0, %c0_0] : memref<16x64xbf16, #tpu.memory_space<vmem>>, vector<16x64xbf16>
    %c0_1 = arith.constant 0 : index
    %c0_2 = arith.constant 0 : index
    %1 = vector.load %arg2[%c0_1, %c0_2] : memref<64x4xbf16, #tpu.memory_space<vmem>>, vector<64x4xbf16>
    %cst = arith.constant dense<0.000000e+00> : vector<16x4xf32>
    %2 = tpu.matmul %0, %1, %cst {dimension_numbers = #tpu.dot_dimension_numbers<[1], [0], [0], [1], [0, 0, 1, 1], [], []>} : vector<16x64xbf16>, vector<64x4xbf16>, vector<16x4xf32> -> vector<16x4xf32>
    %c0_3 = arith.constant 0 : index
    %c0_4 = arith.constant 0 : index
    %3 = vector.load %arg3[%c0_3, %c0_4] : memref<1x4xf32, #tpu.memory_space<vmem>>, vector<1x4xf32>
    %4 = vector.broadcast %3 : vector<1x4xf32> to vector<16x4xf32>
    %5 = arith.addf %2, %4 : vector<16x4xf32>
    %cst_5 = arith.constant 0.000000e+00 : f32
    %6 = vector.broadcast %cst_5 : f32 to vector<16x4xf32>
    %7 = arith.maximumf %5, %6 : vector<16x4xf32>
    %c0_6 = arith.constant 0 : index
    %c0_7 = arith.constant 0 : index
    %8 = vector.load %arg4[%c0_6, %c0_7] : memref<4x4xf32, #tpu.memory_space<vmem>>, vector<4x4xf32>
    %cst_8 = arith.constant dense<0.000000e+00> : vector<16x4xf32>
    %9 = tpu.matmul %7, %8, %cst_8 {dimension_numbers = #tpu.dot_dimension_numbers<[1], [0], [0], [1], [0, 0, 1, 1], [], []>} : vector<16x4xf32>, vector<4x4xf32>, vector<16x4xf32> -> vector<16x4xf32>
    %cst_9 = arith.constant 0.000000e+00 : f32
    %10 = vector.broadcast %cst_9 : f32 to vector<16x4xf32>
    %11 = arith.maximumf %9, %10 : vector<16x4xf32>
    %c0_10 = arith.constant 0 : index
    %c0_11 = arith.constant 0 : index
    %12 = vector.load %arg5[%c0_10, %c0_11] : memref<4x4xf32, #tpu.memory_space<vmem>>, vector<4x4xf32>
    %cst_12 = arith.constant dense<0.000000e+00> : vector<16x4xf32>
    %13 = tpu.matmul %11, %12, %cst_12 {dimension_numbers = #tpu.dot_dimension_numbers<[1], [0], [0], [1], [0, 0, 1, 1], [], []>} : vector<16x4xf32>, vector<4x4xf32>, vector<16x4xf32> -> vector<16x4xf32>
    %14 = arith.negf %13 : vector<16x4xf32>
    %15 = math.exp %14 : vector<16x4xf32>
    %cst_13 = arith.constant 1.000000e+00 : f32
    %16 = vector.broadcast %cst_13 : f32 to vector<16x4xf32>
    %17 = arith.addf %16, %15 : vector<16x4xf32>
    %18 = arith.divf %16, %17 : vector<16x4xf32>
    %19 = arith.mulf %7, %18 : vector<16x4xf32>
    %20 = arith.truncf %19 : vector<16x4xf32> to vector<16x4xbf16>
    %c0_14 = arith.constant 0 : index
    %c0_15 = arith.constant 0 : index
    %21 = vector.load %arg6[%c0_14, %c0_15] : memref<4x64xbf16, #tpu.memory_space<vmem>>, vector<4x64xbf16>
    %cst_16 = arith.constant dense<0.000000e+00> : vector<16x64xf32>
    %22 = tpu.matmul %20, %21, %cst_16 {dimension_numbers = #tpu.dot_dimension_numbers<[1], [0], [0], [1], [0, 0, 1, 1], [], []>} : vector<16x4xbf16>, vector<4x64xbf16>, vector<16x64xf32> -> vector<16x64xf32>
    %c0_17 = arith.constant 0 : index
    %c0_18 = arith.constant 0 : index
    %23 = vector.load %arg7[%c0_17, %c0_18] : memref<1x64xf32, #tpu.memory_space<vmem>>, vector<1x64xf32>
    %24 = vector.broadcast %23 : vector<1x64xf32> to vector<16x64xf32>
    %25 = arith.addf %22, %24 : vector<16x64xf32>
    %c0_19 = arith.constant 0 : index
    %26 = memref.load %arg8[%c0_19] : memref<1xf32, #tpu.memory_space<smem>>
    %27 = arith.extf %0 : vector<16x64xbf16> to vector<16x64xf32>
    %28 = vector.broadcast %26 : f32 to vector<16x64xf32>
    %29 = arith.mulf %28, %27 : vector<16x64xf32>
    %30 = arith.addf %25, %29 : vector<16x64xf32>
    %c0_20 = arith.constant 0 : index
    %c0_21 = arith.constant 0 : index
    %31 = vector.load %arg9[%c0_20, %c0_21] : memref<16x64xf32, #tpu.memory_space<vmem>>, vector<16x64xf32>
    tpu.vector_store %arg9[%c0_20, %c0_21], %30 {strides = array<i32>} : memref<16x64xf32, #tpu.memory_space<vmem>>, vector<16x64xf32>,
    return
  }
  func.func @transform_0(%arg0: i32) -> (i32, i32) {
    %c0_i32 = arith.constant 0 : i32
    %c0_i32_0 = arith.constant 0 : i32
    return %arg0, %c0_i32 : i32, i32
  }
  func.func @transform_1(%arg0: i32) -> (i32, i32) {
    %c0_i32 = arith.constant 0 : i32
    %c0_i32_0 = arith.constant 0 : i32
    %c0_i32_1 = arith.constant 0 : i32
    return %c0_i32, %c0_i32_0 : i32, i32
  }
  func.func @transform_2(%arg0: i32) -> (i32, i32) {
    %c0_i32 = arith.constant 0 : i32
    %c0_i32_0 = arith.constant 0 : i32
    %c0_i32_1 = arith.constant 0 : i32
    return %c0_i32, %c0_i32_0 : i32, i32
  }
  func.func @transform_3(%arg0: i32) -> (i32, i32) {
    %c0_i32 = arith.constant 0 : i32
    %c0_i32_0 = arith.constant 0 : i32
    %c0_i32_1 = arith.constant 0 : i32
    return %c0_i32, %c0_i32_0 : i32, i32
  }
  func.func @transform_4(%arg0: i32) -> (i32, i32) {
    %c0_i32 = arith.constant 0 : i32
    %c0_i32_0 = arith.constant 0 : i32
    %c0_i32_1 = arith.constant 0 : i32
    return %c0_i32, %c0_i32_0 : i32, i32
  }
  func.func @transform_5(%arg0: i32) -> (i32, i32) {
    %c0_i32 = arith.constant 0 : i32
    %c0_i32_0 = arith.constant 0 : i32
    %c0_i32_1 = arith.constant 0 : i32
    return %c0_i32, %c0_i32_0 : i32, i32
  }
  func.func @transform_6(%arg0: i32) -> (i32, i32) {
    %c0_i32 = arith.constant 0 : i32
    %c0_i32_0 = arith.constant 0 : i32
    %c0_i32_1 = arith.constant 0 : i32
    return %c0_i32, %c0_i32_0 : i32, i32
  }
  func.func @transform_7(%arg0: i32) -> i32 {
    %c0_i32 = arith.constant 0 : i32
    %c0_i32_0 = arith.constant 0 : i32
    return %c0_i32 : i32
  }
  func.func @transform_8(%arg0: i32) -> (i32, i32) {
    %c0_i32 = arith.constant 0 : i32
    %c0_i32_0 = arith.constant 0 : i32
    return %arg0, %c0_i32 : i32, i32
  }
}

</mosaic_0001>

<llo_original>
// kernel: tpu_custom_call.1
$region0: #{tpu_custom_call.1}
  #allocation0 [shape = 'u32[]', space=smem, size = 0x4, offset = 0x4, fixed_abs, tag = 'smem constant byte address 0x4 - core index']
  #allocation1 [shape = 'u32[144,128]{1,0:T(1,128)}', space=vmem, size = 0x12000, scoped, tag = 'internal scratch']
  #allocation2 [shape = 'f32[1]{0:T(128)S(6)}', space=smem, size = 0x200, scoped, tag = 'scoped memory for tpu_custom_call.1']
  %s0 = inlined_call_operand.vmem [shape: bf16[16,64], index: 0, kind: input, shape index: {}]
  %s1 = inlined_call_operand.vmem [shape: bf16[64,4], index: 1, kind: input, shape index: {}]
  %s2 = inlined_call_operand.vmem [shape: f32[1,4], index: 2, kind: input, shape index: {}]
  %s3 = inlined_call_operand.vmem [shape: f32[4,4], index: 3, kind: input, shape index: {}]
  %s4 = inlined_call_operand.vmem [shape: f32[4,4], index: 4, kind: input, shape index: {}]
  %s5 = inlined_call_operand.vmem [shape: bf16[4,64], index: 5, kind: input, shape index: {}]
  %s6 = inlined_call_operand.vmem [shape: f32[1,64], index: 6, kind: input, shape index: {}]
  %s7 = inlined_call_operand.<no memory space> [shape: f32[1], index: 7, kind: input, shape index: {}]
  %s8 = inlined_call_operand.hbm [shape: f32[16,64], index: 8, kind: output, shape index: {}]
  %s9 = sld [smem:[#allocation0]]
  $region42: #{tpu_custom_call.1} parent=0
    _
  %s11 = ssub.s32 1, %s9
  %s12 = scalar_select 0, %s11, %s9
  %13 = sst [smem:[#allocation2]] %s7
  $region1: #{tpu_custom_call.1} parent=0
    #allocation3 [shape = 'u8[8192]{0}', space=vmem, size = 0x2000, scoped, tag = 'output window, operand 0, single buffered']
    #allocation4 [shape = 's32[1]{0}', space=sflag, size = 0x4, scoped, tag = 'scoped memory for tpu_custom_call.1']
    %14 = vsyncpa [#allocation4], 0
    // Predicated region
    $region2: #{tpu_custom_call.1} parent=1 // pred_check
      _
    $region3: #{tpu_custom_call.1} parent=1 // pred_check_branch
      %16 = sbr.rel (0) target = $region5
    $region4: #{tpu_custom_call.1} parent=1 // pred_region
      _
    $region5: #{tpu_custom_call.1} parent=1 // pred_fallthru
      _
    // Predicated region
    $region6: #{tpu_custom_call.1} parent=1 // pred_check
      _
    $region7: #{tpu_custom_call.1} parent=1 // pred_check_branch
      %18 = sbr.rel (0) target = $region9
    $region8: #{tpu_custom_call.1} parent=1 // pred_region
      _
    $region9: #{tpu_custom_call.1} parent=1 // pred_fallthru
      _
    // Predicated region
    $region10: #{tpu_custom_call.1} parent=1 // pred_check
      _
    $region11: #{tpu_custom_call.1} parent=1 // pred_check_branch
      %20 = sbr.rel (0) target = $region13
    $region12: #{tpu_custom_call.1} parent=1 // pred_region
      _
    $region13: #{tpu_custom_call.1} parent=1 // pred_fallthru
      _
    // Predicated region
    $region14: #{tpu_custom_call.1} parent=1 // pred_check
      _
    $region15: #{tpu_custom_call.1} parent=1 // pred_check_branch
      %22 = sbr.rel (0) target = $region17
    $region16: #{tpu_custom_call.1} parent=1 // pred_region
      _
    $region17: #{tpu_custom_call.1} parent=1 // pred_fallthru
      _
    // Predicated region
    $region18: #{tpu_custom_call.1} parent=1 // pred_check
      _
    $region19: #{tpu_custom_call.1} parent=1 // pred_check_branch
      %24 = sbr.rel (0) target = $region21
    $region20: #{tpu_custom_call.1} parent=1 // pred_region
      _
    $region21: #{tpu_custom_call.1} parent=1 // pred_fallthru
      _
    // Predicated region
    $region22: #{tpu_custom_call.1} parent=1 // pred_check
      _
    $region23: #{tpu_custom_call.1} parent=1 // pred_check_branch
      %26 = sbr.rel (0) target = $region25
    $region24: #{tpu_custom_call.1} parent=1 // pred_region
      _
    $region25: #{tpu_custom_call.1} parent=1 // pred_fallthru
      _
    // Predicated region
    $region26: #{tpu_custom_call.1} parent=1 // pred_check
      _
    $region27: #{tpu_custom_call.1} parent=1 // pred_check_branch
      %28 = sbr.rel (0) target = $region29
    $region28: #{tpu_custom_call.1} parent=1 // pred_region
      _
    $region29: #{tpu_custom_call.1} parent=1 // pred_fallthru
      _
    // Predicated region
    $region30: #{tpu_custom_call.1} parent=1 // pred_check
      _
    $region31: #{tpu_custom_call.1} parent=1 // pred_check_branch
      %30 = sbr.rel (0) target = $region33
    $region32: #{tpu_custom_call.1} parent=1 // pred_region
      _
    $region33: #{tpu_custom_call.1} parent=1 // pred_fallthru
      _
    %v32 = vld [vmem:[%s0] sm:$0xf]
    %v33 = vld [vmem:[%s0 + $0x4] sm:$0xf]
    %v34 = vld [vmem:[%s1] sm:$0xf]
    %v35 = vld [vmem:[%s1 + $0x4] sm:$0xf]
    %v36 = vld [vmem:[%s1 + $0x8] sm:$0xf]
    %v37 = vld [vmem:[%s1 + $0xc] sm:$0xf]
    %v38 = vld [vmem:[%s1 + $0x10] sm:$0xf]
    %v39 = vld [vmem:[%s1 + $0x14] sm:$0xf]
    %v40 = vld [vmem:[%s1 + $0x18] sm:$0xf]
    %v41 = vld [vmem:[%s1 + $0x1c] sm:$0xf]
    %v42 = vld [vmem:[%s2] sm:$0x1]
    %v44 = vlaneseq
    %v45 = vshrl.u32 %v44, 7
    %v46 = vsub.s32 0, %v45
    %v47 = vrot.slane %v42, %v46
    %v51 = vunpack.c.l.b16 %v32
    %v52 = vunpack.c.l.b16 %v33
    %v53 = vpack.c.b16 %v52, %v51
    %v62 = vunpack.c.l.b16 %v34
    %v63 = vunpack.c.l.b16 %v35
    %v64 = vunpack.c.l.b16 %v36
    %v65 = vunpack.c.l.b16 %v37
    %v66 = vunpack.c.l.b16 %v38
    %v67 = vunpack.c.l.b16 %v39
    %v68 = vunpack.c.l.b16 %v40
    %v69 = vunpack.c.l.b16 %v41
    %v70 = vpack.c.b16 %v63, %v62
    %v71 = vpack.c.b16 %v65, %v64
    %v72 = vpack.c.b16 %v67, %v66
    %v73 = vpack.c.b16 %v69, %v68
    %vm78 = vcmask 523264
    %v80 = vsel %vm78, %v53, 0
    %82 = vmatprep.subr.bf16.mxu0 0
    %83 = vmatpush1.bf16.msra.mxu0 %v70
    %84 = vmatprep.subr.bf16.mxu0 0
    %85 = vmatpush1.bf16.msra.mxu0 %v71
    %86 = vmatprep.subr.bf16.mxu0 0
    %87 = vmatpush1.bf16.msra.mxu0 %v72
    %88 = vmatprep.subr.bf16.mxu0 0
    %89 = vmatpush1.bf16.msra.mxu0 %v73
    %90 = vmatprep.subr.bf16.mxu0 0
    %91 = vmatpush1.bf16.msra.mxu0 0
    %92 = vmatprep.subr.bf16.mxu0 0
    %93 = vmatpush1.bf16.msra.mxu0 0
    %94 = vmatprep.subr.bf16.mxu0 0
    %95 = vmatpush1.bf16.msra.mxu0 0
    %96 = vmatprep.subr.bf16.mxu0 0
    %97 = vmatpush1.bf16.msra.mxu0 0
    %98 = vmatprep.subr.bf16.mxu0 0
    %99 = vmatpush1.bf16.msra.mxu0 0
    %100 = vmatprep.subr.bf16.mxu0 0
    %101 = vmatpush1.bf16.msra.mxu0 0
    %102 = vmatprep.subr.bf16.mxu0 0
    %103 = vmatpush1.bf16.msra.mxu0 0
    %104 = vmatprep.subr.bf16.mxu0 0
    %105 = vmatpush1.bf16.msra.mxu0 0
    %106 = vmatprep.subr.bf16.mxu0 0
    %107 = vmatpush1.bf16.msra.mxu0 0
    %108 = vmatprep.subr.bf16.mxu0 0
    %109 = vmatpush1.bf16.msra.mxu0 0
    %110 = vmatprep.subr.bf16.mxu0 0
    %111 = vmatpush1.bf16.msra.mxu0 0
    %112 = vmatprep.subr.bf16.mxu0 0
    %113 = vmatpush1.bf16.msra.mxu0 0
    %114 = vmatprep.mubr.bf16.mxu0 0
    %115 = vmatmul.mubr.bf16.gmra.mrb[0].mxu0 %v80
    %v116 = vpop.f32.mrb[0].mxu0
    %v117 = vadd.f32 %v47, %v116
    %v118 = vpop.f32.mrb[0].mxu0
    %v119 = vpop.f32.mrb[0].mxu0
    %v120 = vadd.f32 %v47, %v119
    %v121 = vpop.f32.mrb[0].mxu0
    %122 = vdwg.mxu0
    %v123 = vmax.f32 %v117, 0.0
    %v124 = vmax.f32 %v120, 0.0
    %v125 = vld [vmem:[%s3] sm:$0xf]
    %vm126 = vcmask 31744
    %v128 = vsel %vm126, %v123, 0
    %v131 = vsel %vm126, %v124, 0
    %vm133 = vcmask 1043456
    %v135 = vsel %vm133, %v125, 0
    %137 = vmatprep.subr.mxu0 0.0
    %138 = vmatpush1.msra.mxu0 %v135
    %139 = vmatprep.subr.mxu0 0.0
    %140 = vmatpush1.msra.mxu0 0.0
    %141 = vmatprep.subr.mxu0 0.0
    %142 = vmatpush1.msra.mxu0 0.0
    %143 = vmatprep.subr.mxu0 0.0
    %144 = vmatpush1.msra.mxu0 0.0
    %145 = vmatprep.subr.mxu0 0.0
    %146 = vmatpush1.msra.mxu0 0.0
    %147 = vmatprep.subr.mxu0 0.0
    %148 = vmatpush1.msra.mxu0 0.0
    %149 = vmatprep.subr.mxu0 0.0
    %150 = vmatpush1.msra.mxu0 0.0
    %151 = vmatprep.subr.mxu0 0.0
    %152 = vmatpush1.msra.mxu0 0.0
    %153 = vmatprep.subr.mxu0 0.0
    %154 = vmatpush1.msra.mxu0 0.0
    %155 = vmatprep.subr.mxu0 0.0
    %156 = vmatpush1.msra.mxu0 0.0
    %157 = vmatprep.subr.mxu0 0.0
    %158 = vmatpush1.msra.mxu0 0.0
    %159 = vmatprep.subr.mxu0 0.0
    %160 = vmatpush1.msra.mxu0 0.0
    %161 = vmatprep.subr.mxu0 0.0
    %162 = vmatpush1.msra.mxu0 0.0
    %163 = vmatprep.subr.mxu0 0.0
    %164 = vmatpush1.msra.mxu0 0.0
    %165 = vmatprep.subr.mxu0 0.0
    %166 = vmatpush1.msra.mxu0 0.0
    %167 = vmatprep.subr.mxu0 0.0
    %168 = vmatpush1.msra.mxu0 0.0
    %169 = vmatprep.subr.mxu0 0.0
    %170 = vmatpush1.msra.mxu0 0.0
    %171 = vmatprep.subr.mxu0 0.0
    %172 = vmatpush1.msra.mxu0 0.0
    %173 = vmatprep.subr.mxu0 0.0
    %174 = vmatpush1.msra.mxu0 0.0
    %175 = vmatprep.subr.mxu0 0.0
    %176 = vmatpush1.msra.mxu0 0.0
    %177 = vmatprep.subr.mxu0 0.0
    %178 = vmatpush1.msra.mxu0 0.0
    %179 = vmatprep.subr.mxu0 0.0
    %180 = vmatpush1.msra.mxu0 0.0
    %181 = vmatprep.subr.mxu0 0.0
    %182 = vmatpush1.msra.mxu0 0.0
    %183 = vmatprep.subr.mxu0 0.0
    %184 = vmatpush1.msra.mxu0 0.0
    %185 = vmatprep.subr.mxu0 0.0
    %186 = vmatpush1.msra.mxu0 0.0
    %187 = vmatprep.subr.mxu0 0.0
    %188 = vmatpush1.msra.mxu0 0.0
    %189 = vmatprep.subr.mxu0 0.0
    %190 = vmatpush1.msra.mxu0 0.0
    %191 = vmatprep.subr.mxu0 0.0
    %192 = vmatpush1.msra.mxu0 0.0
    %193 = vmatprep.subr.mxu0 0.0
    %194 = vmatpush1.msra.mxu0 0.0
    %195 = vmatprep.subr.mxu0 0.0
    %196 = vmatpush1.msra.mxu0 0.0
    %197 = vmatprep.subr.mxu0 0.0
    %198 = vmatpush1.msra.mxu0 0.0
    %199 = vmatprep.subr.mxu0 0.0
    %200 = vmatpush1.msra.mxu0 0.0
    %201 = vmatprep.mubr.f32.mxu0 0.0
    %202 = vmatmul.mubr.f32.gmra.mrb[0].mxu0 %v128
    %v203 = vpop.f32.mrb[0].mxu0
    %v204 = vadd.f32 0.0, %v203
    %v205 = vpop.f32.mrb[0].mxu0
    %206 = vmatprep.mubr.f32.mxu0 0.0
    %207 = vmatmul.mubr.f32.gmra.mrb[0].mxu0 %v131
    %v208 = vpop.f32.mrb[0].mxu0
    %v209 = vadd.f32 0.0, %v208
    %v210 = vpop.f32.mrb[0].mxu0
    %211 = vdwg.mxu0
    %v212 = vmax.f32 %v204, 0.0
    %v213 = vmax.f32 %v209, 0.0
    %v214 = vld [vmem:[%s4] sm:$0xf]
    %v216 = vsel %vm126, %v212, 0
    %v219 = vsel %vm126, %v213, 0
    %v222 = vsel %vm133, %v214, 0
    %224 = vmatprep.subr.mxu0 0.0
    %225 = vmatpush1.msra.mxu0 %v222
    %226 = vmatprep.subr.mxu0 0.0
    %227 = vmatpush1.msra.mxu0 0.0
    %228 = vmatprep.subr.mxu0 0.0
    %229 = vmatpush1.msra.mxu0 0.0
    %230 = vmatprep.subr.mxu0 0.0
    %231 = vmatpush1.msra.mxu0 0.0
    %232 = vmatprep.subr.mxu0 0.0
    %233 = vmatpush1.msra.mxu0 0.0
    %234 = vmatprep.subr.mxu0 0.0
    %235 = vmatpush1.msra.mxu0 0.0
    %236 = vmatprep.subr.mxu0 0.0
    %237 = vmatpush1.msra.mxu0 0.0
    %238 = vmatprep.subr.mxu0 0.0
    %239 = vmatpush1.msra.mxu0 0.0
    %240 = vmatprep.subr.mxu0 0.0
    %241 = vmatpush1.msra.mxu0 0.0
    %242 = vmatprep.subr.mxu0 0.0
    %243 = vmatpush1.msra.mxu0 0.0
    %244 = vmatprep.subr.mxu0 0.0
    %245 = vmatpush1.msra.mxu0 0.0
    %246 = vmatprep.subr.mxu0 0.0
    %247 = vmatpush1.msra.mxu0 0.0
    %248 = vmatprep.subr.mxu0 0.0
    %249 = vmatpush1.msra.mxu0 0.0
    %250 = vmatprep.subr.mxu0 0.0
    %251 = vmatpush1.msra.mxu0 0.0
    %252 = vmatprep.subr.mxu0 0.0
    %253 = vmatpush1.msra.mxu0 0.0
    %254 = vmatprep.subr.mxu0 0.0
    %255 = vmatpush1.msra.mxu0 0.0
    %256 = vmatprep.subr.mxu0 0.0
    %257 = vmatpush1.msra.mxu0 0.0
    %258 = vmatprep.subr.mxu0 0.0
    %259 = vmatpush1.msra.mxu0 0.0
    %260 = vmatprep.subr.mxu0 0.0
    %261 = vmatpush1.msra.mxu0 0.0
    %262 = vmatprep.subr.mxu0 0.0
    %263 = vmatpush1.msra.mxu0 0.0
    %264 = vmatprep.subr.mxu0 0.0
    %265 = vmatpush1.msra.mxu0 0.0
    %266 = vmatprep.subr.mxu0 0.0
    %267 = vmatpush1.msra.mxu0 0.0
    %268 = vmatprep.subr.mxu0 0.0
    %269 = vmatpush1.msra.mxu0 0.0
    %270 = vmatprep.subr.mxu0 0.0
    %271 = vmatpush1.msra.mxu0 0.0
    %272 = vmatprep.subr.mxu0 0.0
    %273 = vmatpush1.msra.mxu0 0.0
    %274 = vmatprep.subr.mxu0 0.0
    %275 = vmatpush1.msra.mxu0 0.0
    %276 = vmatprep.subr.mxu0 0.0
    %277 = vmatpush1.msra.mxu0 0.0
    %278 = vmatprep.subr.mxu0 0.0
    %279 = vmatpush1.msra.mxu0 0.0
    %280 = vmatprep.subr.mxu0 0.0
    %281 = vmatpush1.msra.mxu0 0.0
    %282 = vmatprep.subr.mxu0 0.0
    %283 = vmatpush1.msra.mxu0 0.0
    %284 = vmatprep.subr.mxu0 0.0
    %285 = vmatpush1.msra.mxu0 0.0
    %286 = vmatprep.subr.mxu0 0.0
    %287 = vmatpush1.msra.mxu0 0.0
    %288 = vmatprep.mubr.f32.mxu0 0.0
    %289 = vmatmul.mubr.f32.gmra.mrb[0].mxu0 %v216
    %v290 = vpop.f32.mrb[0].mxu0
    %v291 = vadd.f32 0.0, %v290
    %v292 = vpop.f32.mrb[0].mxu0
    %293 = vmatprep.mubr.f32.mxu0 0.0
    %294 = vmatmul.mubr.f32.gmra.mrb[0].mxu0 %v219
    %v295 = vpop.f32.mrb[0].mxu0
    %v296 = vadd.f32 0.0, %v295
    %v297 = vpop.f32.mrb[0].mxu0
    %298 = vdwg.mxu0
    %v299 = vxor.u32 %v291, 2147483648
    %v300 = vxor.u32 %v296, 2147483648
    %v301 = vmul.f32 %v299, 1.442695
    %v302 = vpow.pop %v301
    %v303 = vmul.f32 %v300, 1.442695
    %v304 = vpow.pop %v303
    %v305 = vadd.f32 %v302, 1.0
    %v306 = vadd.f32 %v304, 1.0
    %v307 = vrcp.pop %v305
    %v308 = vmul.f32 1.0, %v307
    %v309 = vrcp.pop %v306
    %v310 = vmul.f32 1.0, %v309
    %v311 = vmul.f32 %v123, %v308
    %v312 = vmul.f32 %v124, %v310
    %v313 = vpack.c.bf16 %v312, %v311
    %v314 = vld [vmem:[%s5] sm:$0x3]
    %v315 = vld [vmem:[%s6] sm:$0x1]
    %v317 = vlaneseq
    %v318 = vshrl.u32 %v317, 7
    %v319 = vsub.s32 0, %v318
    %v320 = vrot.slane %v315, %v319
    %v323 = vsel %vm126, %v313, 0
    %vm325 = vcmask 1041408
    %v327 = vsel %vm325, %v314, 0
    %329 = vmatprep.subr.bf16.mxu0 0
    %330 = vmatpush1.bf16.msra.mxu0 %v327
    %331 = vmatprep.subr.bf16.mxu0 0
    %332 = vmatpush1.bf16.msra.mxu0 0
    %333 = vmatprep.subr.bf16.mxu0 0
    %334 = vmatpush1.bf16.msra.mxu0 0
    %335 = vmatprep.subr.bf16.mxu0 0
    %336 = vmatpush1.bf16.msra.mxu0 0
    %337 = vmatprep.subr.bf16.mxu0 0
    %338 = vmatpush1.bf16.msra.mxu0 0
    %339 = vmatprep.subr.bf16.mxu0 0
    %340 = vmatpush1.bf16.msra.mxu0 0
    %341 = vmatprep.subr.bf16.mxu0 0
    %342 = vmatpush1.bf16.msra.mxu0 0
    %343 = vmatprep.subr.bf16.mxu0 0
    %344 = vmatpush1.bf16.msra.mxu0 0
    %345 = vmatprep.subr.bf16.mxu0 0
    %346 = vmatpush1.bf16.msra.mxu0 0
    %347 = vmatprep.subr.bf16.mxu0 0
    %348 = vmatpush1.bf16.msra.mxu0 0
    %349 = vmatprep.subr.bf16.mxu0 0
    %350 = vmatpush1.bf16.msra.mxu0 0
    %351 = vmatprep.subr.bf16.mxu0 0
    %352 = vmatpush1.bf16.msra.mxu0 0
    %353 = vmatprep.subr.bf16.mxu0 0
    %354 = vmatpush1.bf16.msra.mxu0 0
    %355 = vmatprep.subr.bf16.mxu0 0
    %356 = vmatpush1.bf16.msra.mxu0 0
    %357 = vmatprep.subr.bf16.mxu0 0
    %358 = vmatpush1.bf16.msra.mxu0 0
    %359 = vmatprep.subr.bf16.mxu0 0
    %360 = vmatpush1.bf16.msra.mxu0 0
    %361 = vmatprep.mubr.bf16.mxu0 0
    %362 = vmatmul.mubr.bf16.gmra.mrb[0].mxu0 %v323
    %v363 = vpop.f32.mrb[0].mxu0
    %v364 = vadd.f32 %v320, %v363
    %v365 = vpop.f32.mrb[0].mxu0
    %v366 = vpop.f32.mrb[0].mxu0
    %v367 = vadd.f32 %v320, %v366
    %v368 = vpop.f32.mrb[0].mxu0
    %369 = vdwg.mxu0
    %s370 = sld [smem:[#allocation2]]
    %v371 = vunpack.c.l.bf16 %v32
    %v372 = vunpack.c.l.bf16 %v33
    %v373 = vstv %s370
    %v374 = vmul.f32 %v373, %v371
    %v375 = vmul.f32 %v373, %v372
    %v376 = vadd.f32 %v364, %v374
    %v377 = vadd.f32 %v367, %v375
    %378 = vst.msk [vmem:[#allocation3] sm:$0xff] %vm78, %v376
    %379 = vst.msk [vmem:[#allocation3 + $0x8] sm:$0xff] %vm78, %v377
    // Predicated region
    $region34: #{tpu_custom_call.1} parent=1 // pred_check
      _
    $region35: #{tpu_custom_call.1} parent=1 // pred_check_branch
      %381 = sbr.rel (0) target = $region37
    $region36: #{tpu_custom_call.1} parent=1 // pred_region
      %s383 = ssub.s32 256, 256
      %384 = vsyncadd [#allocation4], %s383
      %s385 = sshll.u32 [#allocation3], 4
      %s386 = int_to_ptr.vmem [resolvable:$true] %s385
      %391 = dma.vmem_to_hbm [thread:$0]  %s386, 256, %s8, [#allocation4], 128, 128, 8
    $region37: #{tpu_custom_call.1} parent=1 // pred_fallthru
      _
    // Predicated region
    $region38: #{tpu_custom_call.1} parent=1 // pred_check
      _
    $region39: #{tpu_custom_call.1} parent=1 // pred_check_branch
      %393 = sbr.rel (0) target = $region41
    $region40: #{tpu_custom_call.1} parent=1 // pred_region
      %394 = dma.done [#allocation4], 256
    $region41: #{tpu_custom_call.1} parent=1 // pred_fallthru
      _
    %395 = vsyncpa [#allocation4], 1

</llo_original>
